<compile_context>
chip_gen: v7x
topology: tpu7x:2x2x1
jax: 0.10.0
libtpu: 0.0.40
codegen_flags: <defaults>
</compile_context>

<pallas_src>
import functools

import jax
import jax.numpy as jnp
from jax.experimental import pallas as pl
from jax.experimental.pallas import tpu as pltpu


def _merge_kernel(x1_ref, x2_ref, x3_ref, w1_ref, w2_ref, w3_ref, b_ref, o_ref):
    # o (C_out, tile_p) = W1 @ x1 + W2 @ x2 + W3 @ x3 + b
    acc = jnp.dot(w1_ref[...], x1_ref[0], preferred_element_type=jnp.float32)
    acc = acc + jnp.dot(w2_ref[...], x2_ref[0], preferred_element_type=jnp.float32)
    acc = acc + jnp.dot(w3_ref[...], x3_ref[0], preferred_element_type=jnp.float32)
    # Bias added last: avoids materializing a (C_out, tile_p) broadcast temp.
    acc = acc + b_ref[...].astype(jnp.float32)           # (C_out, 1) -> bcast lanes
    o_ref[0] = acc.astype(o_ref.dtype)                   # only cast happens here


def _round_up(x, m):
    return pl.cdiv(x, m) * m


def merge_from_em_pallas(feature_nchw, f_em_z_nchw, f_em_out_nchw, weight, bias,
                         *, tile_p=16384, out_dtype=None):
    """Apply MergeFromEM.forward (the 1x1 merge conv).

    feature_nchw:  (N, C1, H, W)
    f_em_z_nchw:   (N, C2, H, W)
    f_em_out_nchw: (N, C3, H, W)
    weight:        (C_out, C1+C2+C3, 1, 1)   (PyTorch Conv2d layout)
    bias:          (C_out,)
    out_dtype:     optional output dtype (e.g. jnp.bfloat16) -- cast happens
                   for free inside the kernel at the store.
    returns:       (N, C_out, H, W)
    """
    N, C1, H, W = feature_nchw.shape
    C2 = f_em_z_nchw.shape[1]
    C3 = f_em_out_nchw.shape[1]
    assert feature_nchw.shape[2:4] == f_em_z_nchw.shape[2:4] == f_em_out_nchw.shape[2:4]
    C_out, C_in = weight.shape[0], weight.shape[1]
    assert C_in == C1 + C2 + C3

    out_dtype = feature_nchw.dtype if out_dtype is None else jnp.dtype(out_dtype)
    HW = H * W

    # Pixel tile: the largest multiple of 128 up to tile_p (no input padding;
    # Pallas masks the partial last block).
    tile_p_eff = int(min(int(tile_p), _round_up(HW, 128)))
    num_tiles = int(pl.cdiv(HW, tile_p_eff))
    # v7x has 2 TensorCores: keep at least 2 grid iterations so both get work.
    if N * num_tiles < 2 and HW > 128:
        tile_p_eff = int(max(128, _round_up(pl.cdiv(HW, 2), 128)))
        num_tiles = int(pl.cdiv(HW, tile_p_eff))

    # NCHW -> (N, C, H*W) is a free reshape (no data movement, no pad, no cast).
    x1 = feature_nchw.reshape(N, C1, HW)
    x2 = f_em_z_nchw.reshape(N, C2, HW)
    x3 = f_em_out_nchw.reshape(N, C3, HW)

    # Conv weight (C_out, C_in, 1, 1) -> (C_out, C_in), split along input
    # channels (tiny arrays; they stay resident in VMEM across the grid).
    w2d = weight[:, :, 0, 0]
    w1 = w2d[:, :C1]
    w2 = w2d[:, C1:C1 + C2]
    w3 = w2d[:, C1 + C2:]
    b2d = bias.reshape(C_out, 1).astype(jnp.float32)

    # Advisory cost: this op is bandwidth-dominated.
    in_bytes = N * HW * (C1 + C2 + C3) * jnp.dtype(x1.dtype).itemsize
    w_bytes = C_out * C_in * jnp.dtype(w2d.dtype).itemsize + C_out * 4
    out_bytes = N * HW * C_out * jnp.dtype(out_dtype).itemsize
    cost = pl.CostEstimate(flops=2 * N * HW * C_in * C_out,
                           transcendentals=0,
                           bytes_accessed=int(in_bytes + w_bytes + out_bytes))

    out = pl.pallas_call(
        _merge_kernel,
        out_shape=jax.ShapeDtypeStruct((N, C_out, HW), out_dtype),
        grid_spec=pltpu.PrefetchScalarGridSpec(
            num_scalar_prefetch=0,
            grid=(N, num_tiles),
            in_specs=[
                pl.BlockSpec((1, C1, tile_p_eff), lambda n, p: (n, 0, p)),
                pl.BlockSpec((1, C2, tile_p_eff), lambda n, p: (n, 0, p)),
                pl.BlockSpec((1, C3, tile_p_eff), lambda n, p: (n, 0, p)),
                pl.BlockSpec((C_out, C1), lambda n, p: (0, 0)),
                pl.BlockSpec((C_out, C2), lambda n, p: (0, 0)),
                pl.BlockSpec((C_out, C3), lambda n, p: (0, 0)),
                pl.BlockSpec((C_out, 1), lambda n, p: (0, 0)),
            ],
            out_specs=pl.BlockSpec((1, C_out, tile_p_eff),
                                   lambda n, p: (n, 0, p)),
        ),
        compiler_params=pltpu.CompilerParams(
            dimension_semantics=("parallel", "parallel")),
        cost_estimate=cost,
    )(x1, x2, x3, w1, w2, w3, b2d)

    # (N, C_out, H*W) -> (N, C_out, H, W): free reshape, no slicing needed.
    return out.reshape(N, C_out, H, W)


def _reference(feature, f_z, f_out, weight, bias):
    x = jnp.concatenate([feature, f_z, f_out], axis=1)          # (N, C_in, H, W)
    y = jnp.einsum('nchw,oc->nohw', x, weight[:, :, 0, 0])
    return y + bias[None, :, None, None]


if __name__ == "__main__":
    key = jax.random.PRNGKey(0)
    k1, k2, k3, kw, kb = jax.random.split(key, 5)

    # Small shapes consistent with the module: three NCHW maps with equal H, W.
    N, H, W = 2, 16, 16
    C1, C2, C3 = 8, 4, 4          # dec_feature, {key}_z, {key}_out channels
    C_in = C1 + C2 + C3           # in_dim of the 1x1 merge conv
    C_out = 8                     # out_dim

    feature = jax.random.normal(k1, (N, C1, H, W), dtype=jnp.float32)
    f_em_z = jax.random.normal(k2, (N, C2, H, W), dtype=jnp.float32)
    f_em_out = jax.random.normal(k3, (N, C3, H, W), dtype=jnp.float32)

    # Deterministic synthetic parameters (PyTorch Conv2d weight layout).
    weight = jax.random.normal(kw, (C_out, C_in, 1, 1), dtype=jnp.float32) * 0.1
    bias = jax.random.normal(kb, (C_out,), dtype=jnp.float32) * 0.1

    # Mimic the forward's dict plumbing (glue, not part of the kernel).
    fdict = {
        'dec_feature': feature,
        'all_features': {'mykey_z': f_em_z, 'mykey_out': f_em_out},
    }

    run = jax.jit(functools.partial(merge_from_em_pallas, tile_p=16384))
    y = run(
        fdict['dec_feature'],
        fdict['all_features']['mykey_z'],
        fdict['all_features']['mykey_out'],
        weight, bias)
    y = jax.block_until_ready(y)
    fdict['dec_feature'] = y

    y_ref = _reference(feature, f_em_z, f_em_out, weight, bias)
    assert y.shape == (N, C_out, H, W)
    assert jnp.max(jnp.abs(y - y_ref)) < 1e-4

    print("KERNEL_OK")
</pallas_src>

<mosaic_0001>
module attributes {stable_mosaic.version = 11 : i64} {
  func.func @_merge_kernel(%arg0: i32, %arg1: i32, %arg2: memref<1x8x256xf32, #tpu.memory_space<vmem>>, %arg3: memref<1x4x256xf32, #tpu.memory_space<vmem>>, %arg4: memref<1x4x256xf32, #tpu.memory_space<vmem>>, %arg5: memref<8x8xf32, #tpu.memory_space<vmem>>, %arg6: memref<8x4xf32, #tpu.memory_space<vmem>>, %arg7: memref<8x4xf32, #tpu.memory_space<vmem>>, %arg8: memref<8x1xf32, #tpu.memory_space<vmem>>, %arg9: memref<1x8x256xf32, #tpu.memory_space<vmem>>) attributes {dimension_semantics = [#tpu.dimension_semantics<parallel>, #tpu.dimension_semantics<parallel>], iteration_bounds = array<i64: 2, 1>, scalar_prefetch = 0 : i64, scratch_operands = 0 : i64, tpu.core_type = #tpu.core_type<tc>, window_params = [{transform_indices = @transform_0, window_bounds = array<i64: 1, 8, 256>}, {transform_indices = @transform_1, window_bounds = array<i64: 1, 4, 256>}, {transform_indices = @transform_2, window_bounds = array<i64: 1, 4, 256>}, {pipeline_mode = #tpu.pipeline_mode<synchronous>, transform_indices = @transform_3, window_bounds = array<i64: 8, 8>}, {pipeline_mode = #tpu.pipeline_mode<synchronous>, transform_indices = @transform_4, window_bounds = array<i64: 8, 4>}, {pipeline_mode = #tpu.pipeline_mode<synchronous>, transform_indices = @transform_5, window_bounds = array<i64: 8, 4>}, {pipeline_mode = #tpu.pipeline_mode<synchronous>, transform_indices = @transform_6, window_bounds = array<i64: 8, 1>}, {transform_indices = @transform_7, window_bounds = array<i64: 1, 8, 256>}]} {
    %c0 = arith.constant 0 : index
    %c0_0 = arith.constant 0 : index
    %0 = vector.load %arg5[%c0, %c0_0] : memref<8x8xf32, #tpu.memory_space<vmem>>, vector<8x8xf32>
    %c0_1 = arith.constant 0 : index
    %c0_2 = arith.constant 0 : index
    %c0_3 = arith.constant 0 : index
    %1 = vector.load %arg2[%c0_1, %c0_2, %c0_3] : memref<1x8x256xf32, #tpu.memory_space<vmem>>, vector<1x8x256xf32>
    %2 = vector.shape_cast %1 : vector<1x8x256xf32> to vector<8x256xf32>
    %cst = arith.constant dense<0.000000e+00> : vector<8x256xf32>
    %3 = tpu.matmul %0, %2, %cst {dimension_numbers = #tpu.dot_dimension_numbers<[1], [0], [0], [1], [0, 0, 1, 1], [], []>} : vector<8x8xf32>, vector<8x256xf32>, vector<8x256xf32> -> vector<8x256xf32>
    %c0_4 = arith.constant 0 : index
    %c0_5 = arith.constant 0 : index
    %4 = vector.load %arg6[%c0_4, %c0_5] : memref<8x4xf32, #tpu.memory_space<vmem>>, vector<8x4xf32>
    %c0_6 = arith.constant 0 : index
    %c0_7 = arith.constant 0 : index
    %c0_8 = arith.constant 0 : index
    %5 = vector.load %arg3[%c0_6, %c0_7, %c0_8] : memref<1x4x256xf32, #tpu.memory_space<vmem>>, vector<1x4x256xf32>
    %6 = vector.shape_cast %5 : vector<1x4x256xf32> to vector<4x256xf32>
    %cst_9 = arith.constant dense<0.000000e+00> : vector<8x256xf32>
    %7 = tpu.matmul %4, %6, %cst_9 {dimension_numbers = #tpu.dot_dimension_numbers<[1], [0], [0], [1], [0, 0, 1, 1], [], []>} : vector<8x4xf32>, vector<4x256xf32>, vector<8x256xf32> -> vector<8x256xf32>
    %8 = arith.addf %3, %7 : vector<8x256xf32>
    %c0_10 = arith.constant 0 : index
    %c0_11 = arith.constant 0 : index
    %9 = vector.load %arg7[%c0_10, %c0_11] : memref<8x4xf32, #tpu.memory_space<vmem>>, vector<8x4xf32>
    %c0_12 = arith.constant 0 : index
    %c0_13 = arith.constant 0 : index
    %c0_14 = arith.constant 0 : index
    %10 = vector.load %arg4[%c0_12, %c0_13, %c0_14] : memref<1x4x256xf32, #tpu.memory_space<vmem>>, vector<1x4x256xf32>
    %11 = vector.shape_cast %10 : vector<1x4x256xf32> to vector<4x256xf32>
    %cst_15 = arith.constant dense<0.000000e+00> : vector<8x256xf32>
    %12 = tpu.matmul %9, %11, %cst_15 {dimension_numbers = #tpu.dot_dimension_numbers<[1], [0], [0], [1], [0, 0, 1, 1], [], []>} : vector<8x4xf32>, vector<4x256xf32>, vector<8x256xf32> -> vector<8x256xf32>
    %13 = arith.addf %8, %12 : vector<8x256xf32>
    %c0_16 = arith.constant 0 : index
    %c0_17 = arith.constant 0 : index
    %14 = vector.load %arg8[%c0_16, %c0_17] : memref<8x1xf32, #tpu.memory_space<vmem>>, vector<8x1xf32>
    %15 = vector.broadcast %14 : vector<8x1xf32> to vector<8x256xf32>
    %16 = arith.addf %13, %15 : vector<8x256xf32>
    %c0_18 = arith.constant 0 : index
    %c0_19 = arith.constant 0 : index
    %c0_20 = arith.constant 0 : index
    %17 = vector.load %arg9[%c0_18, %c0_19, %c0_20] : memref<1x8x256xf32, #tpu.memory_space<vmem>>, vector<1x8x256xf32>
    %18 = vector.shape_cast %17 : vector<1x8x256xf32> to vector<8x256xf32>
    %19 = vector.shape_cast %16 : vector<8x256xf32> to vector<1x8x256xf32>
    tpu.vector_store %arg9[%c0_18, %c0_19, %c0_20], %19 {strides = array<i32>} : memref<1x8x256xf32, #tpu.memory_space<vmem>>, vector<1x8x256xf32>,
    return
  }
  func.func @transform_0(%arg0: i32, %arg1: i32) -> (i32, i32, i32) {
    %c0_i32 = arith.constant 0 : i32
    %c0_i32_0 = arith.constant 0 : i32
    return %arg0, %c0_i32, %arg1 : i32, i32, i32
  }
  func.func @transform_1(%arg0: i32, %arg1: i32) -> (i32, i32, i32) {
    %c0_i32 = arith.constant 0 : i32
    %c0_i32_0 = arith.constant 0 : i32
    return %arg0, %c0_i32, %arg1 : i32, i32, i32
  }
  func.func @transform_2(%arg0: i32, %arg1: i32) -> (i32, i32, i32) {
    %c0_i32 = arith.constant 0 : i32
    %c0_i32_0 = arith.constant 0 : i32
    return %arg0, %c0_i32, %arg1 : i32, i32, i32
  }
  func.func @transform_3(%arg0: i32, %arg1: i32) -> (i32, i32) {
    %c0_i32 = arith.constant 0 : i32
    %c0_i32_0 = arith.constant 0 : i32
    %c0_i32_1 = arith.constant 0 : i32
    return %c0_i32, %c0_i32_0 : i32, i32
  }
  func.func @transform_4(%arg0: i32, %arg1: i32) -> (i32, i32) {
    %c0_i32 = arith.constant 0 : i32
    %c0_i32_0 = arith.constant 0 : i32
    %c0_i32_1 = arith.constant 0 : i32
    return %c0_i32, %c0_i32_0 : i32, i32
  }
  func.func @transform_5(%arg0: i32, %arg1: i32) -> (i32, i32) {
    %c0_i32 = arith.constant 0 : i32
    %c0_i32_0 = arith.constant 0 : i32
    %c0_i32_1 = arith.constant 0 : i32
    return %c0_i32, %c0_i32_0 : i32, i32
  }
  func.func @transform_6(%arg0: i32, %arg1: i32) -> (i32, i32) {
    %c0_i32 = arith.constant 0 : i32
    %c0_i32_0 = arith.constant 0 : i32
    %c0_i32_1 = arith.constant 0 : i32
    return %c0_i32, %c0_i32_0 : i32, i32
  }
  func.func @transform_7(%arg0: i32, %arg1: i32) -> (i32, i32, i32) {
    %c0_i32 = arith.constant 0 : i32
    %c0_i32_0 = arith.constant 0 : i32
    return %arg0, %c0_i32, %arg1 : i32, i32, i32
  }
}

</mosaic_0001>

<llo_original>
// kernel: merge_from_em_pallas.1
$region0: #{merge_from_em_pallas.1}
  #allocation0 [shape = 'u32[]', space=smem, size = 0x4, offset = 0x4, fixed_abs, tag = 'smem constant byte address 0x4 - core index']
  #allocation1 [shape = 'u32[144,128]{1,0:T(1,128)}', space=vmem, size = 0x12000, scoped, tag = 'internal scratch']
  %s0 = inlined_call_operand.vmem [shape: f32[2,8,256], index: 0, kind: input, shape index: {}]
  %s1 = inlined_call_operand.vmem [shape: f32[2,4,256], index: 1, kind: input, shape index: {}]
  %s2 = inlined_call_operand.vmem [shape: f32[2,4,256], index: 2, kind: input, shape index: {}]
  %s3 = inlined_call_operand.vmem [shape: f32[8,8], index: 3, kind: input, shape index: {}]
  %s4 = inlined_call_operand.vmem [shape: f32[8,4], index: 4, kind: input, shape index: {}]
  %s5 = inlined_call_operand.vmem [shape: f32[8,4], index: 5, kind: input, shape index: {}]
  %s6 = inlined_call_operand.vmem [shape: f32[8,1], index: 6, kind: input, shape index: {}]
  %s7 = inlined_call_operand.vmem [shape: f32[2,8,256], index: 7, kind: output, shape index: {}]
  %s8 = sld [smem:[#allocation0]]
  $region61: #{merge_from_em_pallas.1} parent=0
    _
  %s10 = ssub.s32 1, %s8
  %s11 = scalar_select 0, %s10, %s8
  loop: start=0, step=1, limit=4
  $region2: #{merge_from_em_pallas.1} parent=0 // loop_pre_header
    _
  $region3: #{merge_from_em_pallas.1} parent=0 // loop_header
    %s13 = sphi 0, %s17
    %p14 = scmp.ge.s32.totalorder %s13, 4
    %s20 = sphi 0, %s32
    %s21 = sphi 0, %s28
    %s22 = sphi 0, %s20
    %s23 = sphi 0, %s21
    %s24 = sphi 0, %s22
    %s25 = sphi 0, %s23
    %s37 = sphi 0, %s39
    %s40 = sphi 0, %s37
    %s41 = sphi 0, %s40
    %s57 = sphi 0, %s41
    %s65 = sphi 0, %s67
    %s68 = sphi 0, %s65
    %s69 = sphi 0, %s68
    %s85 = sphi 0, %s69
    %s93 = sphi 0, %s95
    %s96 = sphi 0, %s93
    %s97 = sphi 0, %s96
    %s113 = sphi 0, %s97
    %s117 = sphi 0, %s117
    %s119 = sphi 0, %s117
    %s120 = sphi 0, %s119
    %s134 = sphi 0, %s120
    %s138 = sphi 0, %s138
    %s140 = sphi 0, %s138
    %s141 = sphi 0, %s140
    %s155 = sphi 0, %s141
    %s159 = sphi 0, %s159
    %s161 = sphi 0, %s159
    %s162 = sphi 0, %s161
    %s176 = sphi 0, %s162
    %s180 = sphi 0, %s180
    %s182 = sphi 0, %s180
    %s183 = sphi 0, %s182
    %s197 = sphi 0, %s183
    %s205 = sphi 0, %s207
    %s208 = sphi 0, %s205
    %s209 = sphi 0, %s208
    %s225 = sphi 0, %s209
  $region4: #{merge_from_em_pallas.1} parent=0 // loop_header_branch
    %16 = sbr.rel (%p14) target = $region8
  $region5: #{merge_from_em_pallas.1} parent=0 // loop_body
    %s18 = ssub.s32 %s13, 1
    %s19 = ssub.s32 %s13, 2
    %s26 = sadd.s32 1, %s21
    %p27 = scmp.ge.s32.totalorder %s26, 1
    %s28 = scalar_select %p27, 0, %s26
    %s29 = sadd.s32 1, %s20
    %s30 = scalar_select %p27, %s29, %s20
    %p31 = scmp.ge.s32.totalorder %s30, 2
    %s32 = scalar_select %p31, 0, %s30
    %s33 = ssub.s32 %s20, %s32
    %s34 = ssub.s32 %s21, %s28
    %s35 = sor.u32 %s33, %s34
    %p36 = scmp.eq.s32.totalorder %s35, 0
    %s38 = sadd.s32 %s37, 1
    %s39 = scalar_select %p36, %s37, %s38
    %p42 = pneg %p36
    %p43 = scmp.eq.s32.totalorder %s13, 1
    %p44 = por %p42, %p43
    %p45 = scmp.ne.s32.totalorder %s37, %s40
    %p46 = scmp.eq.s32.totalorder %s13, 0
    %p47 = por %p45, %p46
    %p48 = scmp.ne.s32.totalorder %s37, %s40
    %p49 = scmp.eq.s32.totalorder %s18, 1
    %p50 = por %p48, %p49
    %p51 = scmp.ne.s32.totalorder %s40, %s41
    %p52 = scmp.eq.s32.totalorder %s18, 0
    %p53 = por %p51, %p52
    %p54 = scmp.ne.s32.totalorder %s40, %s41
    %p55 = scmp.eq.s32.totalorder %s19, 1
    %p56 = por %p54, %p55
    %p58 = scmp.ne.s32.totalorder %s41, %s57
    %p59 = scmp.eq.s32.totalorder %s19, 0
    %p60 = por %p58, %p59
    %s61 = ssub.s32 %s20, %s32
    %s62 = ssub.s32 %s21, %s28
    %s63 = sor.u32 %s61, %s62
    %p64 = scmp.eq.s32.totalorder %s63, 0
    %s66 = sadd.s32 %s65, 1
    %s67 = scalar_select %p64, %s65, %s66
    %p70 = pneg %p64
    %p71 = scmp.eq.s32.totalorder %s13, 1
    %p72 = por %p70, %p71
    %p73 = scmp.ne.s32.totalorder %s65, %s68
    %p74 = scmp.eq.s32.totalorder %s13, 0
    %p75 = por %p73, %p74
    %p76 = scmp.ne.s32.totalorder %s65, %s68
    %p77 = scmp.eq.s32.totalorder %s18, 1
    %p78 = por %p76, %p77
    %p79 = scmp.ne.s32.totalorder %s68, %s69
    %p80 = scmp.eq.s32.totalorder %s18, 0
    %p81 = por %p79, %p80
    %p82 = scmp.ne.s32.totalorder %s68, %s69
    %p83 = scmp.eq.s32.totalorder %s19, 1
    %p84 = por %p82, %p83
    %p86 = scmp.ne.s32.totalorder %s69, %s85
    %p87 = scmp.eq.s32.totalorder %s19, 0
    %p88 = por %p86, %p87
    %s89 = ssub.s32 %s20, %s32
    %s90 = ssub.s32 %s21, %s28
    %s91 = sor.u32 %s89, %s90
    %p92 = scmp.eq.s32.totalorder %s91, 0
    %s94 = sadd.s32 %s93, 1
    %s95 = scalar_select %p92, %s93, %s94
    %p98 = pneg %p92
    %p99 = scmp.eq.s32.totalorder %s13, 1
    %p100 = por %p98, %p99
    %p101 = scmp.ne.s32.totalorder %s93, %s96
    %p102 = scmp.eq.s32.totalorder %s13, 0
    %p103 = por %p101, %p102
    %p104 = scmp.ne.s32.totalorder %s93, %s96
    %p105 = scmp.eq.s32.totalorder %s18, 1
    %p106 = por %p104, %p105
    %p107 = scmp.ne.s32.totalorder %s96, %s97
    %p108 = scmp.eq.s32.totalorder %s18, 0
    %p109 = por %p107, %p108
    %p110 = scmp.ne.s32.totalorder %s96, %s97
    %p111 = scmp.eq.s32.totalorder %s19, 1
    %p112 = por %p110, %p111
    %p114 = scmp.ne.s32.totalorder %s97, %s113
    %p115 = scmp.eq.s32.totalorder %s19, 0
    %p116 = por %p114, %p115
    %s118 = sadd.s32 %s117, 1
    %p121 = scmp.eq.s32.totalorder %s13, 1
    %p122 = scmp.ne.s32.totalorder %s117, %s119
    %p123 = scmp.eq.s32.totalorder %s13, 0
    %p124 = por %p122, %p123
    %p125 = scmp.ne.s32.totalorder %s117, %s119
    %p126 = scmp.eq.s32.totalorder %s18, 1
    %p127 = por %p125, %p126
    %p128 = scmp.ne.s32.totalorder %s119, %s120
    %p129 = scmp.eq.s32.totalorder %s18, 0
    %p130 = por %p128, %p129
    %p131 = scmp.ne.s32.totalorder %s119, %s120
    %p132 = scmp.eq.s32.totalorder %s19, 1
    %p133 = por %p131, %p132
    %p135 = scmp.ne.s32.totalorder %s120, %s134
    %p136 = scmp.eq.s32.totalorder %s19, 0
    %p137 = por %p135, %p136
    %s139 = sadd.s32 %s138, 1
    %p142 = scmp.eq.s32.totalorder %s13, 1
    %p143 = scmp.ne.s32.totalorder %s138, %s140
    %p144 = scmp.eq.s32.totalorder %s13, 0
    %p145 = por %p143, %p144
    %p146 = scmp.ne.s32.totalorder %s138, %s140
    %p147 = scmp.eq.s32.totalorder %s18, 1
    %p148 = por %p146, %p147
    %p149 = scmp.ne.s32.totalorder %s140, %s141
    %p150 = scmp.eq.s32.totalorder %s18, 0
    %p151 = por %p149, %p150
    %p152 = scmp.ne.s32.totalorder %s140, %s141
    %p153 = scmp.eq.s32.totalorder %s19, 1
    %p154 = por %p152, %p153
    %p156 = scmp.ne.s32.totalorder %s141, %s155
    %p157 = scmp.eq.s32.totalorder %s19, 0
    %p158 = por %p156, %p157
    %s160 = sadd.s32 %s159, 1
    %p163 = scmp.eq.s32.totalorder %s13, 1
    %p164 = scmp.ne.s32.totalorder %s159, %s161
    %p165 = scmp.eq.s32.totalorder %s13, 0
    %p166 = por %p164, %p165
    %p167 = scmp.ne.s32.totalorder %s159, %s161
    %p168 = scmp.eq.s32.totalorder %s18, 1
    %p169 = por %p167, %p168
    %p170 = scmp.ne.s32.totalorder %s161, %s162
    %p171 = scmp.eq.s32.totalorder %s18, 0
    %p172 = por %p170, %p171
    %p173 = scmp.ne.s32.totalorder %s161, %s162
    %p174 = scmp.eq.s32.totalorder %s19, 1
    %p175 = por %p173, %p174
    %p177 = scmp.ne.s32.totalorder %s162, %s176
    %p178 = scmp.eq.s32.totalorder %s19, 0
    %p179 = por %p177, %p178
    %s181 = sadd.s32 %s180, 1
    %p184 = scmp.eq.s32.totalorder %s13, 1
    %p185 = scmp.ne.s32.totalorder %s180, %s182
    %p186 = scmp.eq.s32.totalorder %s13, 0
    %p187 = por %p185, %p186
    %p188 = scmp.ne.s32.totalorder %s180, %s182
    %p189 = scmp.eq.s32.totalorder %s18, 1
    %p190 = por %p188, %p189
    %p191 = scmp.ne.s32.totalorder %s182, %s183
    %p192 = scmp.eq.s32.totalorder %s18, 0
    %p193 = por %p191, %p192
    %p194 = scmp.ne.s32.totalorder %s182, %s183
    %p195 = scmp.eq.s32.totalorder %s19, 1
    %p196 = por %p194, %p195
    %p198 = scmp.ne.s32.totalorder %s183, %s197
    %p199 = scmp.eq.s32.totalorder %s19, 0
    %p200 = por %p198, %p199
    %s201 = ssub.s32 %s20, %s32
    %s202 = ssub.s32 %s21, %s28
    %s203 = sor.u32 %s201, %s202
    %p204 = scmp.eq.s32.totalorder %s203, 0
    %s206 = sadd.s32 %s205, 1
    %s207 = scalar_select %p204, %s205, %s206
    %p210 = pneg %p204
    %p211 = scmp.eq.s32.totalorder %s13, 1
    %p212 = por %p210, %p211
    %p213 = scmp.ne.s32.totalorder %s205, %s208
    %p214 = scmp.eq.s32.totalorder %s13, 0
    %p215 = por %p213, %p214
    %p216 = scmp.ne.s32.totalorder %s205, %s208
    %p217 = scmp.eq.s32.totalorder %s18, 1
    %p218 = por %p216, %p217
    %p219 = scmp.ne.s32.totalorder %s208, %s209
    %p220 = scmp.eq.s32.totalorder %s18, 0
    %p221 = por %p219, %p220
    %p222 = scmp.ne.s32.totalorder %s208, %s209
    %p223 = scmp.eq.s32.totalorder %s19, 1
    %p224 = por %p222, %p223
    %p226 = scmp.ne.s32.totalorder %s209, %s225
    %p227 = scmp.eq.s32.totalorder %s19, 0
    %p228 = por %p226, %p227
    %p229 = scmp.le.s32.totalorder 1, %s13
    %p230 = scmp.lt.s32.totalorder %s13, 3
    %p231 = pnand %p229, %p230
    %p232 = pneg %p231
    // Predicated region
    $region9: #{merge_from_em_pallas.1} parent=5 // pred_check
      _
    $region10: #{merge_from_em_pallas.1} parent=5 // pred_check_branch
      %234 = sbr.rel (%p231) target = $region12
    $region11: #{merge_from_em_pallas.1} parent=5 // pred_region
      %s235 = ssub.s32 %s13, 1
      // Predicated region
      $region13: #{merge_from_em_pallas.1} parent=11 // pred_check
        %p236 = pneg %p130
      $region14: #{merge_from_em_pallas.1} parent=11 // pred_check_branch
        %238 = sbr.rel (%p236) target = $region16
      $region15: #{merge_from_em_pallas.1} parent=11 // pred_region
        _
      $region16: #{merge_from_em_pallas.1} parent=11 // pred_fallthru
        _
      // Predicated region
      $region17: #{merge_from_em_pallas.1} parent=11 // pred_check
        %p239 = pneg %p151
      $region18: #{merge_from_em_pallas.1} parent=11 // pred_check_branch
        %241 = sbr.rel (%p239) target = $region20
      $region19: #{merge_from_em_pallas.1} parent=11 // pred_region
        _
      $region20: #{merge_from_em_pallas.1} parent=11 // pred_fallthru
        _
      // Predicated region
      $region21: #{merge_from_em_pallas.1} parent=11 // pred_check
        %p242 = pneg %p172
      $region22: #{merge_from_em_pallas.1} parent=11 // pred_check_branch
        %244 = sbr.rel (%p242) target = $region24
      $region23: #{merge_from_em_pallas.1} parent=11 // pred_region
        _
      $region24: #{merge_from_em_pallas.1} parent=11 // pred_fallthru
        _
      // Predicated region
      $region25: #{merge_from_em_pallas.1} parent=11 // pred_check
        %p245 = pneg %p193
      $region26: #{merge_from_em_pallas.1} parent=11 // pred_check_branch
        %247 = sbr.rel (%p245) target = $region28
      $region27: #{merge_from_em_pallas.1} parent=11 // pred_region
        _
      $region28: #{merge_from_em_pallas.1} parent=11 // pred_fallthru
        _
    $region12: #{merge_from_em_pallas.1} parent=5 // pred_fallthru
      _
    %p248 = scmp.lt.s32.totalorder %s13, 2
    // Predicated region
    $region29: #{merge_from_em_pallas.1} parent=5 // pred_check
      %p249 = pneg %p248
    $region30: #{merge_from_em_pallas.1} parent=5 // pred_check_branch
      %251 = sbr.rel (%p249) target = $region32
    $region31: #{merge_from_em_pallas.1} parent=5 // pred_region
      // Predicated region
      $region33: #{merge_from_em_pallas.1} parent=31 // pred_check
        %p252 = pneg %p47
      $region34: #{merge_from_em_pallas.1} parent=31 // pred_check_branch
        %254 = sbr.rel (%p252) target = $region36
      $region35: #{merge_from_em_pallas.1} parent=31 // pred_region
        %s255 = smul.u32 2, %s21
        %p256 = scmp.lt.s32.totalorder %s20, 1
        %s257 = scalar_select %p256, %s20, 1
        %p258 = scmp.lt.s32.totalorder %s255, 1
        %s259 = scalar_select %p258, %s255, 1
        %s260 = smul.addr %s257, 2
        %s261 = sadd.s32 %s259, %s260
        %s262 = smul.addr %s261, 8
        %s263 = scalar_lea.vmem %s0, %s262
        %s264 = smul.u32 2, %s21
      $region36: #{merge_from_em_pallas.1} parent=31 // pred_fallthru
        _
      // Predicated region
      $region37: #{merge_from_em_pallas.1} parent=31 // pred_check
        %p265 = pneg %p75
      $region38: #{merge_from_em_pallas.1} parent=31 // pred_check_branch
        %267 = sbr.rel (%p265) target = $region40
      $region39: #{merge_from_em_pallas.1} parent=31 // pred_region
        %s268 = smul.u32 2, %s21
        %p269 = scmp.lt.s32.totalorder %s20, 1
        %s270 = scalar_select %p269, %s20, 1
        %p271 = scmp.lt.s32.totalorder %s268, 1
        %s272 = scalar_select %p271, %s268, 1
        %s273 = smul.addr %s270, 2
        %s274 = sadd.s32 %s272, %s273
        %s275 = smul.addr %s274, 4
        %s276 = scalar_lea.vmem %s1, %s275
        %s277 = smul.u32 2, %s21
      $region40: #{merge_from_em_pallas.1} parent=31 // pred_fallthru
        _
      // Predicated region
      $region41: #{merge_from_em_pallas.1} parent=31 // pred_check
        %p278 = pneg %p103
      $region42: #{merge_from_em_pallas.1} parent=31 // pred_check_branch
        %280 = sbr.rel (%p278) target = $region44
      $region43: #{merge_from_em_pallas.1} parent=31 // pred_region
        %s281 = smul.u32 2, %s21
        %p282 = scmp.lt.s32.totalorder %s20, 1
        %s283 = scalar_select %p282, %s20, 1
        %p284 = scmp.lt.s32.totalorder %s281, 1
        %s285 = scalar_select %p284, %s281, 1
        %s286 = smul.addr %s283, 2
        %s287 = sadd.s32 %s285, %s286
        %s288 = smul.addr %s287, 4
        %s289 = scalar_lea.vmem %s2, %s288
        %s290 = smul.u32 2, %s21
      $region44: #{merge_from_em_pallas.1} parent=31 // pred_fallthru
        _
    $region32: #{merge_from_em_pallas.1} parent=5 // pred_fallthru
      _
    %p291 = scmp.le.s32.totalorder 1, %s13
    %p292 = scmp.lt.s32.totalorder %s13, 3
    %p293 = pnand %p291, %p292
    %p294 = pneg %p293
    // Predicated region
    $region45: #{merge_from_em_pallas.1} parent=5 // pred_check
      _
    $region46: #{merge_from_em_pallas.1} parent=5 // pred_check_branch
      %296 = sbr.rel (%p293) target = $region48
    $region47: #{merge_from_em_pallas.1} parent=5 // pred_region
      %s297 = ssub.s32 %s13, 1
      %s298 = smul.u32 2, %s23
      %p299 = scmp.lt.s32.totalorder %s22, 1
      %s300 = scalar_select %p299, %s22, 1
      %p301 = scmp.lt.s32.totalorder %s298, 1
      %s302 = scalar_select %p301, %s298, 1
      %s303 = smul.addr %s300, 2
      %s304 = sadd.s32 %s302, %s303
      %s305 = smul.addr %s304, 8
      %s306 = scalar_lea.vmem %s0, %s305
      %p307 = pneg %p53
      %p308 = pneg %p50
      %s309 = smul.u32 2, %s23
      %p310 = scmp.lt.s32.totalorder %s22, 1
      %s311 = scalar_select %p310, %s22, 1
      %p312 = scmp.lt.s32.totalorder %s309, 1
      %s313 = scalar_select %p312, %s309, 1
      %s314 = smul.addr %s311, 2
      %s315 = sadd.s32 %s313, %s314
      %s316 = smul.addr %s315, 4
      %s317 = scalar_lea.vmem %s1, %s316
      %p318 = pneg %p81
      %p319 = pneg %p78
      %s320 = smul.u32 2, %s23
      %p321 = scmp.lt.s32.totalorder %s22, 1
      %s322 = scalar_select %p321, %s22, 1
      %p323 = scmp.lt.s32.totalorder %s320, 1
      %s324 = scalar_select %p323, %s320, 1
      %s325 = smul.addr %s322, 2
      %s326 = sadd.s32 %s324, %s325
      %s327 = smul.addr %s326, 4
      %s328 = scalar_lea.vmem %s2, %s327
      %p329 = pneg %p109
      %p330 = pneg %p106
      %p331 = pneg %p130
      %p332 = pneg %p127
      %p333 = pneg %p151
      %p334 = pneg %p148
      %p335 = pneg %p172
      %p336 = pneg %p169
      %p337 = pneg %p193
      %p338 = pneg %p190
      %p339 = pneg %p221
      %p340 = pneg %p218
      %s341 = smul.u32 2, %s23
      %p342 = scmp.lt.s32.totalorder %s22, 1
      %s343 = scalar_select %p342, %s22, 1
      %p344 = scmp.lt.s32.totalorder %s341, 1
      %s345 = scalar_select %p344, %s341, 1
      %s346 = smul.addr %s343, 2
      %s347 = sadd.s32 %s345, %s346
      %s348 = smul.addr %s347, 8
      %s349 = scalar_lea.vmem %s7, %s348
      %s350 = smul.u32 2, %s23
      %p351 = scmp.lt.s32.totalorder %s22, 1
      %s352 = scalar_select %p351, %s22, 1
      %p353 = scmp.lt.s32.totalorder %s350, 1
      %s354 = scalar_select %p353, %s350, 1
      %s355 = smul.addr %s352, 2
      %s356 = sadd.s32 %s354, %s355
      %s357 = smul.addr %s356, 8
      %s358 = scalar_lea.vmem %s0, %s357
      %s359 = smul.u32 2, %s23
      %s360 = smul.u32 2, %s23
      %p361 = scmp.lt.s32.totalorder %s22, 1
      %s362 = scalar_select %p361, %s22, 1
      %p363 = scmp.lt.s32.totalorder %s360, 1
      %s364 = scalar_select %p363, %s360, 1
      %s365 = smul.addr %s362, 2
      %s366 = sadd.s32 %s364, %s365
      %s367 = smul.addr %s366, 4
      %s368 = scalar_lea.vmem %s1, %s367
      %s369 = smul.u32 2, %s23
      %s370 = smul.u32 2, %s23
      %p371 = scmp.lt.s32.totalorder %s22, 1
      %s372 = scalar_select %p371, %s22, 1
      %p373 = scmp.lt.s32.totalorder %s370, 1
      %s374 = scalar_select %p373, %s370, 1
      %s375 = smul.addr %s372, 2
      %s376 = sadd.s32 %s374, %s375
      %s377 = smul.addr %s376, 4
      %s378 = scalar_lea.vmem %s2, %s377
      %s379 = smul.u32 2, %s23
      %s380 = smul.u32 2, %s23
      %p381 = scmp.lt.s32.totalorder %s22, 1
      %s382 = scalar_select %p381, %s22, 1
      %p383 = scmp.lt.s32.totalorder %s380, 1
      %s384 = scalar_select %p383, %s380, 1
      %s385 = smul.addr %s382, 2
      %s386 = sadd.s32 %s384, %s385
      %s387 = smul.addr %s386, 8
      %s388 = scalar_lea.vmem %s7, %s387
      %s389 = smul.u32 2, %s23
      %v390 = vld [vmem:[%s3] sm:$0xff]
      %v391 = vld [vmem:[%s358] sm:$0xff]
      %v392 = vld [vmem:[%s358 + $0x8] sm:$0xff]
      %v393 = vld [vmem:[%s4] sm:$0xff]
      %v394 = vld [vmem:[%s368] sm:$0xff]
      %v396 = vcombine.high %v394, %v394
      %vm397 = vcmask 31744
      %v399 = vsel %vm397, %v393, 0
      %vm401 = vcmask 1043456
      %v402 = vsel %vm401, %v394, 0
      %v404 = vsel %vm401, %v396, 0
      %406 = vmatprep.subr.mxu0 %v404
      %407 = vmatpush1.msra.mxu0 %v402
      %408 = vmatprep.subr.mxu0 0.0
      %409 = vmatpush1.msra.mxu0 0.0
      %410 = vmatprep.subr.mxu0 0.0
      %411 = vmatpush1.msra.mxu0 0.0
      %412 = vmatprep.subr.mxu0 0.0
      %413 = vmatpush1.msra.mxu0 0.0
      %414 = vmatprep.subr.mxu0 0.0
      %415 = vmatpush1.msra.mxu0 0.0
      %416 = vmatprep.subr.mxu0 0.0
      %417 = vmatpush1.msra.mxu0 0.0
      %418 = vmatprep.subr.mxu0 0.0
      %419 = vmatpush1.msra.mxu0 0.0
      %420 = vmatprep.subr.mxu0 0.0
      %421 = vmatpush1.msra.mxu0 0.0
      %422 = vmatprep.subr.mxu0 0.0
      %423 = vmatpush1.msra.mxu0 0.0
      %424 = vmatprep.subr.mxu0 0.0
      %425 = vmatpush1.msra.mxu0 0.0
      %426 = vmatprep.subr.mxu0 0.0
      %427 = vmatpush1.msra.mxu0 0.0
      %428 = vmatprep.subr.mxu0 0.0
      %429 = vmatpush1.msra.mxu0 0.0
      %430 = vmatprep.subr.mxu0 0.0
      %431 = vmatpush1.msra.mxu0 0.0
      %432 = vmatprep.subr.mxu0 0.0
      %433 = vmatpush1.msra.mxu0 0.0
      %434 = vmatprep.subr.mxu0 0.0
      %435 = vmatpush1.msra.mxu0 0.0
      %436 = vmatprep.subr.mxu0 0.0
      %437 = vmatpush1.msra.mxu0 0.0
      %438 = vmatprep.subr.mxu0 0.0
      %439 = vmatpush1.msra.mxu0 0.0
      %440 = vmatprep.subr.mxu0 0.0
      %441 = vmatpush1.msra.mxu0 0.0
      %442 = vmatprep.subr.mxu0 0.0
      %443 = vmatpush1.msra.mxu0 0.0
      %444 = vmatprep.subr.mxu0 0.0
      %445 = vmatpush1.msra.mxu0 0.0
      %446 = vmatprep.subr.mxu0 0.0
      %447 = vmatpush1.msra.mxu0 0.0
      %448 = vmatprep.subr.mxu0 0.0
      %449 = vmatpush1.msra.mxu0 0.0
      %450 = vmatprep.subr.mxu0 0.0
      %451 = vmatpush1.msra.mxu0 0.0
      %452 = vmatprep.subr.mxu0 0.0
      %453 = vmatpush1.msra.mxu0 0.0
      %454 = vmatprep.subr.mxu0 0.0
      %455 = vmatpush1.msra.mxu0 0.0
      %456 = vmatprep.subr.mxu0 0.0
      %457 = vmatpush1.msra.mxu0 0.0
      %458 = vmatprep.subr.mxu0 0.0
      %459 = vmatpush1.msra.mxu0 0.0
      %460 = vmatprep.subr.mxu0 0.0
      %461 = vmatpush1.msra.mxu0 0.0
      %462 = vmatprep.subr.mxu0 0.0
      %463 = vmatpush1.msra.mxu0 0.0
      %464 = vmatprep.subr.mxu0 0.0
      %465 = vmatpush1.msra.mxu0 0.0
      %466 = vmatprep.subr.mxu0 0.0
      %467 = vmatpush1.msra.mxu0 0.0
      %468 = vmatprep.subr.mxu0 0.0
      %469 = vmatpush1.msra.mxu0 0.0
      %470 = vmatprep.mubr.f32.mxu0 0.0
      %471 = vmatmul.mubr.f32.gmra.mrb[0].mxu0 %v399
      %v472 = vpop.f32.mrb[0].mxu0
      %v473 = vadd.f32 0.0, %v472
      %v474 = vpop.f32.mrb[0].mxu0
      %v475 = vadd.f32 0.0, %v474
      %476 = vdwg.mxu0
      %vm477 = vcmask 64512
      %v479 = vsel %vm477, %v390, 0
      %481 = vmatprep.subr.mxu0 %v392
      %482 = vmatpush1.msra.mxu0 %v391
      %483 = vmatprep.subr.mxu0 0.0
      %484 = vmatpush1.msra.mxu0 0.0
      %485 = vmatprep.subr.mxu0 0.0
      %486 = vmatpush1.msra.mxu0 0.0
      %487 = vmatprep.subr.mxu0 0.0
      %488 = vmatpush1.msra.mxu0 0.0
      %489 = vmatprep.subr.mxu0 0.0
      %490 = vmatpush1.msra.mxu0 0.0
      %491 = vmatprep.subr.mxu0 0.0
      %492 = vmatpush1.msra.mxu0 0.0
      %493 = vmatprep.subr.mxu0 0.0
      %494 = vmatpush1.msra.mxu0 0.0
      %495 = vmatprep.subr.mxu0 0.0
      %496 = vmatpush1.msra.mxu0 0.0
      %497 = vmatprep.subr.mxu0 0.0
      %498 = vmatpush1.msra.mxu0 0.0
      %499 = vmatprep.subr.mxu0 0.0
      %500 = vmatpush1.msra.mxu0 0.0
      %501 = vmatprep.subr.mxu0 0.0
      %502 = vmatpush1.msra.mxu0 0.0
      %503 = vmatprep.subr.mxu0 0.0
      %504 = vmatpush1.msra.mxu0 0.0
      %505 = vmatprep.subr.mxu0 0.0
      %506 = vmatpush1.msra.mxu0 0.0
      %507 = vmatprep.subr.mxu0 0.0
      %508 = vmatpush1.msra.mxu0 0.0
      %509 = vmatprep.subr.mxu0 0.0
      %510 = vmatpush1.msra.mxu0 0.0
      %511 = vmatprep.subr.mxu0 0.0
      %512 = vmatpush1.msra.mxu0 0.0
      %513 = vmatprep.subr.mxu0 0.0
      %514 = vmatpush1.msra.mxu0 0.0
      %515 = vmatprep.subr.mxu0 0.0
      %516 = vmatpush1.msra.mxu0 0.0
      %517 = vmatprep.subr.mxu0 0.0
      %518 = vmatpush1.msra.mxu0 0.0
      %519 = vmatprep.subr.mxu0 0.0
      %520 = vmatpush1.msra.mxu0 0.0
      %521 = vmatprep.subr.mxu0 0.0
      %522 = vmatpush1.msra.mxu0 0.0
      %523 = vmatprep.subr.mxu0 0.0
      %524 = vmatpush1.msra.mxu0 0.0
      %525 = vmatprep.subr.mxu0 0.0
      %526 = vmatpush1.msra.mxu0 0.0
      %527 = vmatprep.subr.mxu0 0.0
      %528 = vmatpush1.msra.mxu0 0.0
      %529 = vmatprep.subr.mxu0 0.0
      %530 = vmatpush1.msra.mxu0 0.0
      %531 = vmatprep.subr.mxu0 0.0
      %532 = vmatpush1.msra.mxu0 0.0
      %533 = vmatprep.subr.mxu0 0.0
      %534 = vmatpush1.msra.mxu0 0.0
      %535 = vmatprep.subr.mxu0 0.0
      %536 = vmatpush1.msra.mxu0 0.0
      %537 = vmatprep.subr.mxu0 0.0
      %538 = vmatpush1.msra.mxu0 0.0
      %539 = vmatprep.subr.mxu0 0.0
      %540 = vmatpush1.msra.mxu0 0.0
      %541 = vmatprep.subr.mxu0 0.0
      %542 = vmatpush1.msra.mxu0 0.0
      %543 = vmatprep.subr.mxu0 0.0
      %544 = vmatpush1.msra.mxu0 0.0
      %545 = vmatprep.mubr.f32.mxu0 0.0
      %546 = vmatmul.mubr.f32.gmra.mrb[0].mxu0 %v479
      %v547 = vpop.f32.mrb[0].mxu0
      %v548 = vadd.f32 %v473, %v547
      %v549 = vpop.f32.mrb[0].mxu0
      %v550 = vadd.f32 %v475, %v549
      %551 = vdwg.mxu0
      %v552 = vld [vmem:[%s5] sm:$0xff]
      %v553 = vld [vmem:[%s378] sm:$0xff]
      %v555 = vcombine.high %v553, %v553
      %v557 = vsel %vm397, %v552, 0
      %v559 = vsel %vm401, %v553, 0
      %v561 = vsel %vm401, %v555, 0
      %563 = vmatprep.subr.mxu0 %v561
      %564 = vmatpush1.msra.mxu0 %v559
      %565 = vmatprep.subr.mxu0 0.0
      %566 = vmatpush1.msra.mxu0 0.0
      %567 = vmatprep.subr.mxu0 0.0
      %568 = vmatpush1.msra.mxu0 0.0
      %569 = vmatprep.subr.mxu0 0.0
      %570 = vmatpush1.msra.mxu0 0.0
      %571 = vmatprep.subr.mxu0 0.0
      %572 = vmatpush1.msra.mxu0 0.0
      %573 = vmatprep.subr.mxu0 0.0
      %574 = vmatpush1.msra.mxu0 0.0
      %575 = vmatprep.subr.mxu0 0.0
      %576 = vmatpush1.msra.mxu0 0.0
      %577 = vmatprep.subr.mxu0 0.0
      %578 = vmatpush1.msra.mxu0 0.0
      %579 = vmatprep.subr.mxu0 0.0
      %580 = vmatpush1.msra.mxu0 0.0
      %581 = vmatprep.subr.mxu0 0.0
      %582 = vmatpush1.msra.mxu0 0.0
      %583 = vmatprep.subr.mxu0 0.0
      %584 = vmatpush1.msra.mxu0 0.0
      %585 = vmatprep.subr.mxu0 0.0
      %586 = vmatpush1.msra.mxu0 0.0
      %587 = vmatprep.subr.mxu0 0.0
      %588 = vmatpush1.msra.mxu0 0.0
      %589 = vmatprep.subr.mxu0 0.0
      %590 = vmatpush1.msra.mxu0 0.0
      %591 = vmatprep.subr.mxu0 0.0
      %592 = vmatpush1.msra.mxu0 0.0
      %593 = vmatprep.subr.mxu0 0.0
      %594 = vmatpush1.msra.mxu0 0.0
      %595 = vmatprep.subr.mxu0 0.0
      %596 = vmatpush1.msra.mxu0 0.0
      %597 = vmatprep.subr.mxu0 0.0
      %598 = vmatpush1.msra.mxu0 0.0
      %599 = vmatprep.subr.mxu0 0.0
      %600 = vmatpush1.msra.mxu0 0.0
      %601 = vmatprep.subr.mxu0 0.0
      %602 = vmatpush1.msra.mxu0 0.0
      %603 = vmatprep.subr.mxu0 0.0
      %604 = vmatpush1.msra.mxu0 0.0
      %605 = vmatprep.subr.mxu0 0.0
      %606 = vmatpush1.msra.mxu0 0.0
      %607 = vmatprep.subr.mxu0 0.0
      %608 = vmatpush1.msra.mxu0 0.0
      %609 = vmatprep.subr.mxu0 0.0
      %610 = vmatpush1.msra.mxu0 0.0
      %611 = vmatprep.subr.mxu0 0.0
      %612 = vmatpush1.msra.mxu0 0.0
      %613 = vmatprep.subr.mxu0 0.0
      %614 = vmatpush1.msra.mxu0 0.0
      %615 = vmatprep.subr.mxu0 0.0
      %616 = vmatpush1.msra.mxu0 0.0
      %617 = vmatprep.subr.mxu0 0.0
      %618 = vmatpush1.msra.mxu0 0.0
      %619 = vmatprep.subr.mxu0 0.0
      %620 = vmatpush1.msra.mxu0 0.0
      %621 = vmatprep.subr.mxu0 0.0
      %622 = vmatpush1.msra.mxu0 0.0
      %623 = vmatprep.subr.mxu0 0.0
      %624 = vmatpush1.msra.mxu0 0.0
      %625 = vmatprep.subr.mxu0 0.0
      %626 = vmatpush1.msra.mxu0 0.0
      %627 = vmatprep.mubr.f32.mxu0 0.0
      %628 = vmatmul.mubr.f32.gmra.mrb[0].mxu0 %v557
      %v629 = vpop.f32.mrb[0].mxu0
      %v630 = vadd.f32 0.0, %v629
      %v631 = vpop.f32.mrb[0].mxu0
      %v632 = vadd.f32 0.0, %v631
      %633 = vdwg.mxu0
      %v634 = vadd.f32 %v548, %v630
      %v635 = vadd.f32 %v550, %v632
      %v636 = vld [vmem:[%s6] sm:$0xff]
      %638 = vset.pattern.permute.xlu0 0
      %639 = vperm.xlu0 %638, %v636
      %v640 = vpop.permute.xlu0 %639
      %v642 = vadd.f32 %v634, %v640
      %v643 = vadd.f32 %v635, %v640
      %644 = vst [vmem:[%s388] sm:$0xff] %v642
      %645 = vst [vmem:[%s388 + $0x8] sm:$0xff] %v643
      %s646 = smul.u32 2, %s23
      %p647 = scmp.lt.s32.totalorder %s22, 1
      %s648 = scalar_select %p647, %s22, 1
      %p649 = scmp.lt.s32.totalorder %s646, 1
      %s650 = scalar_select %p649, %s646, 1
      %s651 = smul.addr %s648, 2
      %s652 = sadd.s32 %s650, %s651
      %s653 = smul.addr %s652, 8
      %s654 = scalar_lea.vmem %s7, %s653
      // Predicated region
      $region49: #{merge_from_em_pallas.1} parent=47 // pred_check
        %p655 = pneg %p218
      $region50: #{merge_from_em_pallas.1} parent=47 // pred_check_branch
        %657 = sbr.rel (%p655) target = $region52
      $region51: #{merge_from_em_pallas.1} parent=47 // pred_region
        %s658 = smul.u32 2, %s23
      $region52: #{merge_from_em_pallas.1} parent=47 // pred_fallthru
        _
    $region48: #{merge_from_em_pallas.1} parent=5 // pred_fallthru
      _
    %p659 = scmp.le.s32.totalorder 2, %s13
    // Predicated region
    $region53: #{merge_from_em_pallas.1} parent=5 // pred_check
      %p660 = pneg %p659
    $region54: #{merge_from_em_pallas.1} parent=5 // pred_check_branch
      %662 = sbr.rel (%p660) target = $region56
    $region55: #{merge_from_em_pallas.1} parent=5 // pred_region
      %s663 = ssub.s32 %s13, 2
      // Predicated region
      $region57: #{merge_from_em_pallas.1} parent=55 // pred_check
        %p664 = pneg %p224
      $region58: #{merge_from_em_pallas.1} parent=55 // pred_check_branch
        %666 = sbr.rel (%p664) target = $region60
      $region59: #{merge_from_em_pallas.1} parent=55 // pred_region
        %s667 = smul.u32 2, %s25
        %p668 = scmp.lt.s32.totalorder %s24, 1
        %s669 = scalar_select %p668, %s24, 1
        %p670 = scmp.lt.s32.totalorder %s667, 1
        %s671 = scalar_select %p670, %s667, 1
        %s672 = smul.addr %s669, 2
        %s673 = sadd.s32 %s671, %s672
        %s674 = smul.addr %s673, 8
        %s675 = scalar_lea.vmem %s7, %s674
      $region60: #{merge_from_em_pallas.1} parent=55 // pred_fallthru
        _
    $region56: #{merge_from_em_pallas.1} parent=5 // pred_fallthru
      _
  $region6: #{merge_from_em_pallas.1} parent=0 // loop_footer
    %s17 = sadd.s32 1, %s13
  $region7: #{merge_from_em_pallas.1} parent=0 // loop_footer_branch
    %12 = sbr.rel target = $region3
  $region8: #{merge_from_em_pallas.1} parent=0 // loop_exit
    _

</llo_original>
